<compile_context>
chip_gen: v5e
topology: v5e:2x2
jax: 0.10.0
libtpu: 0.0.40
codegen_flags: <defaults>
</compile_context>

<pallas_src>
import functools

import jax
import jax.numpy as jnp
from jax import lax
from jax.experimental import pallas as pl
from jax.experimental.pallas import tpu as pltpu


def _non_local_kernel(x_ref, wtp_ref, wg_ref, wf_ref, o_ref, f_acc,
                      *, inter, n_tiles, attn_dtype, exact_recip):
    """grid = (batch, pass, n_tile).

    pass 0: accumulate f[i, j] = sum_n theta[i, n] * phi_pooled[j, n] over
            N tiles into the (I, I) f32 scratch; softmax on the last tile.
    pass 1: per tile, recompute the g projection, y = softmax(f) @ g_pooled,
            z = W_final @ y + x, write the output tile.
    """
    p = pl.program_id(1)
    t = pl.program_id(2)
    x = x_ref[0]                                       # (C, tile_n)

    @pl.when(p == 0)
    def _pass0():
        @pl.when(t == 0)
        def _():
            f_acc[...] = jnp.zeros_like(f_acc)

        # Fused theta/phi projection: one (2I, C) @ (C, tn) MXU matmul, f32 acc.
        proj = jnp.dot(wtp_ref[...], x, preferred_element_type=jnp.float32)
        theta = proj[:inter]                           # (I, tn)
        phi = proj[inter:]                             # (I, tn)  (inter % 8 == 0 keeps this slice aligned)
        # max_pool1d(k=2, s=1) over the intermediate-channel axis, done as an
        # aligned sublane roll on the XLU; the wrap row (index I-1) is garbage
        # and is masked out of the softmax below.
        phi_p = jnp.maximum(phi, pltpu.roll(phi, shift=inter - 1, axis=0))

        # f += theta @ phi_p^T  (bf16 operands, f32 accumulation)
        f_acc[...] += lax.dot_general(
            theta.astype(attn_dtype), phi_p.astype(attn_dtype),
            (((1,), (1,)), ((), ())),
            preferred_element_type=jnp.float32)

        @pl.when(t == n_tiles - 1)
        def _softmax():
            f = f_acc[...]                             # (I, I)
            col = lax.broadcasted_iota(jnp.int32, f.shape, 1)
            f = jnp.where(col >= inter - 1, jnp.float32(-1e30), f)
            f = jnp.exp(f - jnp.max(f, axis=-1, keepdims=True))
            denom = jnp.sum(f, axis=-1, keepdims=True)
            if exact_recip:
                f_acc[...] = f / denom
            else:
                f_acc[...] = f * pl.reciprocal(denom, approx=True)

    @pl.when(p == 1)
    def _pass1():
        # Recompute the (cheap) g projection for this tile: (I, C) @ (C, tn).
        g = jnp.dot(wg_ref[...], x, preferred_element_type=jnp.float32)
        g_p = jnp.maximum(g, pltpu.roll(g, shift=inter - 1, axis=0))
        probs = f_acc[...]                             # (I, I) softmax probs
        # wrap row of g_p gets weight 0 (its column was masked to -1e30).
        y = jnp.dot(probs.astype(attn_dtype), g_p.astype(attn_dtype),
                    preferred_element_type=jnp.float32)   # (I, tn)
        # final 1x1 conv + residual: (C, I) @ (I, tn) + (C, tn)
        z = jnp.dot(wf_ref[...], y.astype(wf_ref.dtype),
                    preferred_element_type=jnp.float32)
        z = z + x.astype(jnp.float32)
        o_ref[0] = z.astype(o_ref.dtype)


def non_local_block(x_nchw, w_theta, w_phi, w_g, w_final, *,
                    tile_n=None, matmul_dtype=jnp.bfloat16, out_dtype=None,
                    vmem_budget_bytes=48 << 20):
    """NonLocalBlock forward (embedded mode, compression=2, strides=1, residual).

    matmul_dtype : dtype used to stream x / the 1x1 weights and for the MXU
        operands of the attention matmuls (accumulation, softmax and residual
        are always f32).  None = exact f32 path.
    out_dtype    : output dtype (default: input dtype).  bf16 halves the HBM
        writeback traffic.
    tile_n       : flattened-spatial tile width (multiple of 128); default is
        derived from a VMEM budget sized for v7x's 64 MiB.
    """
    B, C, H, W = x_nchw.shape
    N = H * W
    I = w_theta.shape[0]
    out_dtype = x_nchw.dtype if out_dtype is None else out_dtype
    in_dtype = x_nchw.dtype if matmul_dtype is None else matmul_dtype
    attn_dtype = jnp.float32 if matmul_dtype is None else matmul_dtype

    in_bytes = jnp.dtype(in_dtype).itemsize
    out_bytes = jnp.dtype(out_dtype).itemsize

    # ---- pick tile_n from a VMEM budget (conservative for v7x's 64 MiB) ----
    n128 = pl.cdiv(N, 128) * 128
    if tile_n is None:
        per_col = (2 * C * in_bytes            # x tile, double-buffered
                   + 2 * C * out_bytes         # out tile, double-buffered
                   + 4 * (2 * I) + 2 * (2 * I)  # proj f32 + bf16 copies
                   + 4 * I + 4 * C)            # y + z f32 temporaries
        fixed = 2 * 4 * I * C * in_bytes + 4 * I * I + (4 << 20)
        avail = max(vmem_budget_bytes - fixed, 2 << 20)
        tile_n = max(128, (avail // per_col) // 128 * 128)
    tile_n = min(int(tile_n), n128)
    tile_n = max(128, (tile_n // 128) * 128)
    n_pad = pl.cdiv(N, tile_n) * tile_n
    n_tiles = n_pad // tile_n

    x = x_nchw.reshape(B, C, N).astype(in_dtype)
    if n_pad != N:
        # Zero padding is exact here: padded columns project to zero and add
        # nothing to the f accumulation; padded output columns are sliced off.
        x = jnp.pad(x, ((0, 0), (0, 0), (0, n_pad - N)))

    # Fused theta||phi weight for pass 0; g weight alone for pass 1.
    w_tp = jnp.concatenate([w_theta, w_phi], axis=0).astype(in_dtype)  # (2I, C)
    w_g_ = w_g.astype(in_dtype)                                        # (I, C)
    wf = w_final.astype(in_dtype)                                      # (C, I)

    # Explicit VMEM limit (review: size against v7x's 64 MiB, not the default).
    est = (2 * C * tile_n * in_bytes + 2 * C * tile_n * out_bytes
           + 2 * (3 * I * C + C * I) * in_bytes
           + I * I * 4
           + tile_n * (2 * I * 4 + 2 * I * 2 + I * 4 + C * 4 + C * 2))
    vmem_limit = int(min(64 << 20, max(32 << 20, int(est * 1.5))))

    kernel = functools.partial(
        _non_local_kernel, inter=I, n_tiles=n_tiles, attn_dtype=attn_dtype,
        exact_recip=(matmul_dtype is None))

    out = pl.pallas_call(
        kernel,
        out_shape=jax.ShapeDtypeStruct((B, C, n_pad), out_dtype),
        grid_spec=pltpu.PrefetchScalarGridSpec(
            num_scalar_prefetch=0,
            grid=(B, 2, n_tiles),
            in_specs=[
                pl.BlockSpec((1, C, tile_n), lambda b, p, t: (b, 0, t)),
                pl.BlockSpec((2 * I, C), lambda b, p, t: (0, 0)),
                pl.BlockSpec((I, C), lambda b, p, t: (0, 0)),
                pl.BlockSpec((C, I), lambda b, p, t: (0, 0)),
            ],
            # Output index is frozen at tile 0 during pass 0 (never written,
            # never flushed) and sweeps the tiles during pass 1.
            out_specs=pl.BlockSpec((1, C, tile_n),
                                   lambda b, p, t: (b, 0, t * p)),
            scratch_shapes=[pltpu.VMEM((I, I), jnp.float32)],
        ),
        compiler_params=pltpu.CompilerParams(
            dimension_semantics=("parallel", "arbitrary", "arbitrary"),
            vmem_limit_bytes=vmem_limit),
    )(x, w_tp, w_g_, wf)

    if n_pad != N:
        out = out[:, :, :N]
    return out.reshape(B, C, H, W)


def _reference(x_nchw, w_theta, w_phi, w_g, w_final):
    # Pure-JAX f32 mirror of the PyTorch forward (embedded mode, compression=2).
    B, C, H, W = x_nchw.shape
    N = H * W
    x = x_nchw.reshape(B, C, N)
    theta = jnp.einsum('ic,bcn->bin', w_theta, x)        # (B, I, N)
    phi   = jnp.einsum('ic,bcn->bin', w_phi, x)
    g     = jnp.einsum('ic,bcn->bin', w_g, x)
    phi_p = jnp.maximum(phi[:, :-1, :], phi[:, 1:, :])   # (B, I-1, N)
    g_p   = jnp.maximum(g[:, :-1, :],   g[:, 1:, :])     # (B, I-1, N)
    f = jnp.einsum('bin,bjn->bij', theta, phi_p)         # (B, I, I-1)
    f = jax.nn.softmax(f, axis=-1)
    y = jnp.einsum('bij,bjn->bin', f, g_p)               # (B, I, N)
    z = jnp.einsum('ci,bin->bcn', w_final, y) + x        # (B, C, N)
    return z.reshape(B, C, H, W)


if __name__ == "__main__":
    # Small test shapes; I = C // 2 kept a multiple of 8 so the phi slice and
    # the sublane rolls stay tile-aligned (production C, I satisfy this too).
    B, C, H, W = 2, 16, 16, 16
    I = C // 2

    key = jax.random.PRNGKey(0)
    kx, kt, kp, kg, kf = jax.random.split(key, 5)
    x = jax.random.normal(kx, (B, C, H, W), dtype=jnp.float32)
    # 1x1 conv weights, no bias (torch Conv2d(C, I, 1).weight squeezed).
    w_theta = jax.random.normal(kt, (I, C), dtype=jnp.float32) * 0.1
    w_phi   = jax.random.normal(kp, (I, C), dtype=jnp.float32) * 0.1
    w_g     = jax.random.normal(kg, (I, C), dtype=jnp.float32) * 0.1
    w_final = jax.random.normal(kf, (C, I), dtype=jnp.float32) * 0.1

    ref = _reference(x, w_theta, w_phi, w_g, w_final)

    # 1) Default perf path: bf16 MXU operands / streaming, f32 acc + output.
    out = jax.block_until_ready(non_local_block(x, w_theta, w_phi, w_g, w_final))
    assert out.shape == (B, C, H, W)
    assert bool(jnp.allclose(out, ref, atol=3e-2, rtol=3e-2)), \
        float(jnp.max(jnp.abs(out - ref)))

    # 2) N-tiled path (tile_n=128 -> 2 N tiles; exercises the f accumulator
    #    and the two-pass output scheme).
    out_t = jax.block_until_ready(
        non_local_block(x, w_theta, w_phi, w_g, w_final, tile_n=128))
    assert bool(jnp.allclose(out_t, ref, atol=3e-2, rtol=3e-2)), \
        float(jnp.max(jnp.abs(out_t - ref)))

    # 3) Exact f32 path (tight check of kernel semantics, exact softmax).
    out_f32 = jax.block_until_ready(
        non_local_block(x, w_theta, w_phi, w_g, w_final, matmul_dtype=None))
    assert bool(jnp.allclose(out_f32, ref, atol=5e-3, rtol=5e-3)), \
        float(jnp.max(jnp.abs(out_f32 - ref)))

    # 4) Non-lane-aligned spatial size (N = 100 padded to 128) and B = 4.
    x2 = jax.random.normal(jax.random.PRNGKey(1), (4, C, 10, 10), jnp.float32)
    ref2 = _reference(x2, w_theta, w_phi, w_g, w_final)
    out2 = jax.block_until_ready(non_local_block(x2, w_theta, w_phi, w_g, w_final))
    assert bool(jnp.allclose(out2, ref2, atol=3e-2, rtol=3e-2)), \
        float(jnp.max(jnp.abs(out2 - ref2)))

    # 5) bf16 output dtype (halved writeback traffic), loose tolerance.
    out_bf = jax.block_until_ready(
        non_local_block(x, w_theta, w_phi, w_g, w_final, out_dtype=jnp.bfloat16))
    assert out_bf.dtype == jnp.bfloat16
    assert bool(jnp.allclose(out_bf.astype(jnp.float32), ref, atol=1e-1, rtol=1e-1))

    print("KERNEL_OK")
</pallas_src>

<mosaic_0001>
module attributes {stable_mosaic.version = 11 : i64} {
  func.func @_non_local_kernel(%arg0: i32, %arg1: i32, %arg2: i32, %arg3: memref<1x16x256xbf16, #tpu.memory_space<vmem>>, %arg4: memref<16x16xbf16, #tpu.memory_space<vmem>>, %arg5: memref<8x16xbf16, #tpu.memory_space<vmem>>, %arg6: memref<16x8xbf16, #tpu.memory_space<vmem>>, %arg7: memref<1x16x256xf32, #tpu.memory_space<vmem>>, %arg8: memref<8x8xf32, #tpu.memory_space<vmem>>) attributes {dimension_semantics = [#tpu.dimension_semantics<parallel>, #tpu.dimension_semantics<arbitrary>, #tpu.dimension_semantics<arbitrary>], iteration_bounds = array<i64: 2, 2, 1>, scalar_prefetch = 0 : i64, scratch_operands = 1 : i64, tpu.core_type = #tpu.core_type<tc>, window_params = [{transform_indices = @transform_0, window_bounds = array<i64: 1, 16, 256>}, {pipeline_mode = #tpu.pipeline_mode<synchronous>, transform_indices = @transform_1, window_bounds = array<i64: 16, 16>}, {pipeline_mode = #tpu.pipeline_mode<synchronous>, transform_indices = @transform_2, window_bounds = array<i64: 8, 16>}, {pipeline_mode = #tpu.pipeline_mode<synchronous>, transform_indices = @transform_3, window_bounds = array<i64: 16, 8>}, {transform_indices = @transform_4, window_bounds = array<i64: 1, 16, 256>}]} {
    %c0 = arith.constant 0 : index
    %c0_0 = arith.constant 0 : index
    %c0_1 = arith.constant 0 : index
    %0 = vector.load %arg3[%c0, %c0_0, %c0_1] : memref<1x16x256xbf16, #tpu.memory_space<vmem>>, vector<1x16x256xbf16>
    %1 = vector.shape_cast %0 : vector<1x16x256xbf16> to vector<16x256xbf16>
    %c0_i32 = arith.constant 0 : i32
    %2 = arith.cmpi eq, %arg1, %c0_i32 : i32
    %3 = arith.extui %2 : i1 to i32
    %c0_i32_2 = arith.constant 0 : i32
    %4 = arith.cmpi ne, %3, %c0_i32_2 : i32
    scf.if %4 {
      %c0_i32_4 = arith.constant 0 : i32
      %8 = arith.cmpi eq, %arg2, %c0_i32_4 : i32
      %9 = arith.extui %8 : i1 to i32
      %c0_i32_5 = arith.constant 0 : i32
      %10 = arith.cmpi ne, %9, %c0_i32_5 : i32
      scf.if %10 {
        %cst_15 = arith.constant 0.000000e+00 : f32
        %26 = vector.broadcast %cst_15 : f32 to vector<8x8xf32>
        %c0_16 = arith.constant 0 : index
        %c0_17 = arith.constant 0 : index
        %27 = vector.load %arg8[%c0_16, %c0_17] : memref<8x8xf32, #tpu.memory_space<vmem>>, vector<8x8xf32>
        tpu.vector_store %arg8[%c0_16, %c0_17], %26 {strides = array<i32>} : memref<8x8xf32, #tpu.memory_space<vmem>>, vector<8x8xf32>,
      } else {
      }
      %c0_6 = arith.constant 0 : index
      %c0_7 = arith.constant 0 : index
      %11 = vector.load %arg4[%c0_6, %c0_7] : memref<16x16xbf16, #tpu.memory_space<vmem>>, vector<16x16xbf16>
      %cst = arith.constant dense<0.000000e+00> : vector<16x256xf32>
      %12 = tpu.matmul %11, %1, %cst {dimension_numbers = #tpu.dot_dimension_numbers<[1], [0], [0], [1], [0, 0, 1, 1], [], []>} : vector<16x16xbf16>, vector<16x256xbf16>, vector<16x256xf32> -> vector<16x256xf32>
      %13 = vector.extract_strided_slice %12 {offsets = [0, 0], sizes = [8, 256], strides = [1, 1]} : vector<16x256xf32> to vector<8x256xf32>
      %14 = vector.extract_strided_slice %12 {offsets = [8, 0], sizes = [8, 256], strides = [1, 1]} : vector<16x256xf32> to vector<8x256xf32>
      %c7_i32 = arith.constant 7 : i32
      %15 = tpu.dynamic_rotate %14 by %c7_i32 dim 0 : vector<8x256xf32>, i32 -> vector<8x256xf32>
      %16 = arith.maximumf %14, %15 : vector<8x256xf32>
      %c0_8 = arith.constant 0 : index
      %c0_9 = arith.constant 0 : index
      %17 = vector.load %arg8[%c0_8, %c0_9] : memref<8x8xf32, #tpu.memory_space<vmem>>, vector<8x8xf32>
      %18 = arith.truncf %13 : vector<8x256xf32> to vector<8x256xbf16>
      %19 = arith.truncf %16 : vector<8x256xf32> to vector<8x256xbf16>
      %cst_10 = arith.constant dense<0.000000e+00> : vector<8x8xf32>
      %20 = tpu.matmul %18, %19, %cst_10 {dimension_numbers = #tpu.dot_dimension_numbers<[1], [1], [0], [0], [0, 0, 1, 0], [], []>} : vector<8x256xbf16>, vector<8x256xbf16>, vector<8x8xf32> -> vector<8x8xf32>
      %21 = arith.addf %17, %20 : vector<8x8xf32>
      %c0_11 = arith.constant 0 : index
      %c0_12 = arith.constant 0 : index
      %22 = vector.load %arg8[%c0_11, %c0_12] : memref<8x8xf32, #tpu.memory_space<vmem>>, vector<8x8xf32>
      tpu.vector_store %arg8[%c0_11, %c0_12], %21 {strides = array<i32>} : memref<8x8xf32, #tpu.memory_space<vmem>>, vector<8x8xf32>,
      %c0_i32_13 = arith.constant 0 : i32
      %23 = arith.cmpi eq, %arg2, %c0_i32_13 : i32
      %24 = arith.extui %23 : i1 to i32
      %c0_i32_14 = arith.constant 0 : i32
      %25 = arith.cmpi ne, %24, %c0_i32_14 : i32
      scf.if %25 {
        %c0_15 = arith.constant 0 : index
        %c0_16 = arith.constant 0 : index
        %26 = vector.load %arg8[%c0_15, %c0_16] : memref<8x8xf32, #tpu.memory_space<vmem>>, vector<8x8xf32>
        %27 = tpu.iota {dimensions = array<i32: 1>} : vector<8x8xi32>
        %c7_i32_17 = arith.constant 7 : i32
        %28 = vector.broadcast %c7_i32_17 : i32 to vector<8x8xi32>
        %29 = arith.cmpi sge, %27, %28 : vector<8x8xi32>
        %cst_18 = arith.constant -1.000000e+30 : f32
        %30 = vector.broadcast %cst_18 : f32 to vector<8x8xf32>
        %31 = arith.select %29, %30, %26 : vector<8x8xi1>, vector<8x8xf32>
        %cst_19 = arith.constant dense<0xFF800000> : vector<8xf32>
        %32 = vector.multi_reduction <maximumf>, %31, %cst_19 [1] : vector<8x8xf32> to vector<8xf32>
        %33 = vector.shape_cast %32 : vector<8xf32> to vector<8x1xf32>
        %34 = vector.broadcast %33 : vector<8x1xf32> to vector<8x8xf32>
        %35 = arith.subf %31, %34 : vector<8x8xf32>
        %36 = math.exp %35 : vector<8x8xf32>
        %cst_20 = arith.constant dense<0.000000e+00> : vector<8xf32>
        %37 = vector.multi_reduction <add>, %36, %cst_20 [1] : vector<8x8xf32> to vector<8xf32>
        %38 = vector.shape_cast %37 : vector<8xf32> to vector<8x1xf32>
        %39 = tpu.reciprocal %38 {approx = true} : vector<8x1xf32> -> vector<8x1xf32>
        %40 = vector.broadcast %39 : vector<8x1xf32> to vector<8x8xf32>
        %41 = arith.mulf %36, %40 : vector<8x8xf32>
        %c0_21 = arith.constant 0 : index
        %c0_22 = arith.constant 0 : index
        %42 = vector.load %arg8[%c0_21, %c0_22] : memref<8x8xf32, #tpu.memory_space<vmem>>, vector<8x8xf32>
        tpu.vector_store %arg8[%c0_21, %c0_22], %41 {strides = array<i32>} : memref<8x8xf32, #tpu.memory_space<vmem>>, vector<8x8xf32>,
      } else {
      }
    } else {
    }
    %c1_i32 = arith.constant 1 : i32
    %5 = arith.cmpi eq, %arg1, %c1_i32 : i32
    %6 = arith.extui %5 : i1 to i32
    %c0_i32_3 = arith.constant 0 : i32
    %7 = arith.cmpi ne, %6, %c0_i32_3 : i32
    scf.if %7 {
      %c0_4 = arith.constant 0 : index
      %c0_5 = arith.constant 0 : index
      %8 = vector.load %arg5[%c0_4, %c0_5] : memref<8x16xbf16, #tpu.memory_space<vmem>>, vector<8x16xbf16>
      %cst = arith.constant dense<0.000000e+00> : vector<8x256xf32>
      %9 = tpu.matmul %8, %1, %cst {dimension_numbers = #tpu.dot_dimension_numbers<[1], [0], [0], [1], [0, 0, 1, 1], [], []>} : vector<8x16xbf16>, vector<16x256xbf16>, vector<8x256xf32> -> vector<8x256xf32>
      %c7_i32 = arith.constant 7 : i32
      %10 = tpu.dynamic_rotate %9 by %c7_i32 dim 0 : vector<8x256xf32>, i32 -> vector<8x256xf32>
      %11 = arith.maximumf %9, %10 : vector<8x256xf32>
      %c0_6 = arith.constant 0 : index
      %c0_7 = arith.constant 0 : index
      %12 = vector.load %arg8[%c0_6, %c0_7] : memref<8x8xf32, #tpu.memory_space<vmem>>, vector<8x8xf32>
      %13 = arith.truncf %12 : vector<8x8xf32> to vector<8x8xbf16>
      %14 = arith.truncf %11 : vector<8x256xf32> to vector<8x256xbf16>
      %cst_8 = arith.constant dense<0.000000e+00> : vector<8x256xf32>
      %15 = tpu.matmul %13, %14, %cst_8 {dimension_numbers = #tpu.dot_dimension_numbers<[1], [0], [0], [1], [0, 0, 1, 1], [], []>} : vector<8x8xbf16>, vector<8x256xbf16>, vector<8x256xf32> -> vector<8x256xf32>
      %c0_9 = arith.constant 0 : index
      %c0_10 = arith.constant 0 : index
      %16 = vector.load %arg6[%c0_9, %c0_10] : memref<16x8xbf16, #tpu.memory_space<vmem>>, vector<16x8xbf16>
      %17 = arith.truncf %15 : vector<8x256xf32> to vector<8x256xbf16>
      %cst_11 = arith.constant dense<0.000000e+00> : vector<16x256xf32>
      %18 = tpu.matmul %16, %17, %cst_11 {dimension_numbers = #tpu.dot_dimension_numbers<[1], [0], [0], [1], [0, 0, 1, 1], [], []>} : vector<16x8xbf16>, vector<8x256xbf16>, vector<16x256xf32> -> vector<16x256xf32>
      %19 = arith.extf %1 : vector<16x256xbf16> to vector<16x256xf32>
      %20 = arith.addf %18, %19 : vector<16x256xf32>
      %c0_12 = arith.constant 0 : index
      %c0_13 = arith.constant 0 : index
      %c0_14 = arith.constant 0 : index
      %21 = vector.load %arg7[%c0_12, %c0_13, %c0_14] : memref<1x16x256xf32, #tpu.memory_space<vmem>>, vector<1x16x256xf32>
      %22 = vector.shape_cast %21 : vector<1x16x256xf32> to vector<16x256xf32>
      %23 = vector.shape_cast %20 : vector<16x256xf32> to vector<1x16x256xf32>
      tpu.vector_store %arg7[%c0_12, %c0_13, %c0_14], %23 {strides = array<i32>} : memref<1x16x256xf32, #tpu.memory_space<vmem>>, vector<1x16x256xf32>,
    } else {
    }
    return
  }
  func.func @transform_0(%arg0: i32, %arg1: i32, %arg2: i32) -> (i32, i32, i32) {
    %c0_i32 = arith.constant 0 : i32
    %c0_i32_0 = arith.constant 0 : i32
    return %arg0, %c0_i32, %arg2 : i32, i32, i32
  }
  func.func @transform_1(%arg0: i32, %arg1: i32, %arg2: i32) -> (i32, i32) {
    %c0_i32 = arith.constant 0 : i32
    %c0_i32_0 = arith.constant 0 : i32
    %c0_i32_1 = arith.constant 0 : i32
    return %c0_i32, %c0_i32_0 : i32, i32
  }
  func.func @transform_2(%arg0: i32, %arg1: i32, %arg2: i32) -> (i32, i32) {
    %c0_i32 = arith.constant 0 : i32
    %c0_i32_0 = arith.constant 0 : i32
    %c0_i32_1 = arith.constant 0 : i32
    return %c0_i32, %c0_i32_0 : i32, i32
  }
  func.func @transform_3(%arg0: i32, %arg1: i32, %arg2: i32) -> (i32, i32) {
    %c0_i32 = arith.constant 0 : i32
    %c0_i32_0 = arith.constant 0 : i32
    %c0_i32_1 = arith.constant 0 : i32
    return %c0_i32, %c0_i32_0 : i32, i32
  }
  func.func @transform_4(%arg0: i32, %arg1: i32, %arg2: i32) -> (i32, i32, i32) {
    %0 = arith.muli %arg2, %arg1 : i32
    %c0_i32 = arith.constant 0 : i32
    %c0_i32_0 = arith.constant 0 : i32
    return %arg0, %c0_i32, %0 : i32, i32, i32
  }
}

</mosaic_0001>

<llo_original>
// kernel: tpu_custom_call.1
$region0: #{tpu_custom_call.1}
  #allocation0 [shape = 'u32[]', space=smem, size = 0x4, offset = 0x4, fixed_abs, tag = 'smem constant byte address 0x4 - core index']
  #allocation1 [shape = 'u32[72,128]{1,0:T(1,128)}', space=vmem, size = 0x9000, scoped, tag = 'internal scratch']
  #allocation2 [shape = 'f32[8,8]{1,0:T(8,128)}', space=vmem, size = 0x1000, scoped, tag = 'scratch operand']
  %s0 = inlined_call_operand.hbm [shape: bf16[2,16,256], index: 0, kind: input, shape index: {}]
  %s1 = inlined_call_operand.vmem [shape: bf16[16,16], index: 1, kind: input, shape index: {}]
  %s2 = inlined_call_operand.vmem [shape: bf16[8,16], index: 2, kind: input, shape index: {}]
  %s3 = inlined_call_operand.vmem [shape: bf16[16,8], index: 3, kind: input, shape index: {}]
  %s4 = inlined_call_operand.hbm [shape: f32[2,16,256], index: 4, kind: output, shape index: {}]
  %s5 = sld [smem:[#allocation0]]
  $region69: #{tpu_custom_call.1} parent=0
    _
  %s7 = ssub.s32 1, %s5
  %s8 = scalar_select 0, %s7, %s5
  $region1: #{tpu_custom_call.1} parent=0
    #allocation3 [shape = 'u8[16384]{0}', space=vmem, size = 0x4000, scoped, tag = 'input window, operand 0']
    #allocation4 [shape = 's32[2]{0}', space=sflag, size = 0x8, scoped, tag = 'scoped memory for tpu_custom_call.1']
    #allocation5 [shape = 's32[2]{0}', space=sflag, size = 0x8, scoped, tag = 'scoped memory for tpu_custom_call.1']
    #allocation6 [shape = 'u8[32768]{0}', space=vmem, size = 0x8000, scoped, tag = 'output window, operand 0']
    %9 = vsyncpa [#allocation4], 0
    %s10 = scalar_lea.sflag [#allocation4], 1
    %11 = vsyncpa %s10, 0
    %12 = vsyncpa [#allocation5], 0
    %s13 = scalar_lea.sflag [#allocation5], 1
    %14 = vsyncpa %s13, 0
    loop: start=0, step=1, limit=6
    $region2: #{tpu_custom_call.1} parent=1 // loop_pre_header
      _
    $region3: #{tpu_custom_call.1} parent=1 // loop_header
      %s16 = sphi 0, %s20
      %p17 = scmp.ge.s32.totalorder %s16, 6
      %s23 = sphi 0, %s42
      %s24 = sphi 0, %s38
      %s25 = sphi 0, %s34
      %s26 = sphi 0, %s23
      %s27 = sphi 0, %s24
      %s28 = sphi 0, %s25
      %s29 = sphi 0, %s26
      %s30 = sphi 0, %s27
      %s31 = sphi 0, %s28
      %s47 = sphi 0, %s49
      %s50 = sphi 0, %s47
      %s51 = sphi 0, %s50
      %s67 = sphi 0, %s51
      %s71 = sphi 0, %s71
      %s73 = sphi 0, %s71
      %s74 = sphi 0, %s73
      %s88 = sphi 0, %s74
      %s92 = sphi 0, %s92
      %s94 = sphi 0, %s92
      %s95 = sphi 0, %s94
      %s109 = sphi 0, %s95
      %s113 = sphi 0, %s113
      %s115 = sphi 0, %s113
      %s116 = sphi 0, %s115
      %s130 = sphi 0, %s116
      %s140 = sphi 0, %s142
      %s143 = sphi 0, %s140
      %s144 = sphi 0, %s143
      %s160 = sphi 0, %s144
    $region4: #{tpu_custom_call.1} parent=1 // loop_header_branch
      %19 = sbr.rel (%p17) target = $region8
    $region5: #{tpu_custom_call.1} parent=1 // loop_body
      %s21 = ssub.s32 %s16, 1
      %s22 = ssub.s32 %s16, 2
      %s32 = sadd.s32 1, %s25
      %p33 = scmp.ge.s32.totalorder %s32, 1
      %s34 = scalar_select %p33, 0, %s32
      %s35 = sadd.s32 1, %s24
      %s36 = scalar_select %p33, %s35, %s24
      %p37 = scmp.ge.s32.totalorder %s36, 2
      %s38 = scalar_select %p37, 0, %s36
      %s39 = sadd.s32 1, %s23
      %s40 = scalar_select %p37, %s39, %s23
      %p41 = scmp.ge.s32.totalorder %s40, 2
      %s42 = scalar_select %p41, 0, %s40
      %s43 = ssub.s32 %s23, %s42
      %s44 = ssub.s32 %s25, %s34
      %s45 = sor.u32 %s43, %s44
      %p46 = scmp.eq.s32.totalorder %s45, 0
      %s48 = sadd.s32 %s47, 1
      %s49 = scalar_select %p46, %s47, %s48
      %p52 = pneg %p46
      %p53 = scmp.eq.s32.totalorder %s16, 3
      %p54 = por %p52, %p53
      %p55 = scmp.ne.s32.totalorder %s47, %s50
      %p56 = scmp.eq.s32.totalorder %s16, 0
      %p57 = por %p55, %p56
      %p58 = scmp.ne.s32.totalorder %s47, %s50
      %p59 = scmp.eq.s32.totalorder %s21, 3
      %p60 = por %p58, %p59
      %p61 = scmp.ne.s32.totalorder %s50, %s51
      %p62 = scmp.eq.s32.totalorder %s21, 0
      %p63 = por %p61, %p62
      %p64 = scmp.ne.s32.totalorder %s50, %s51
      %p65 = scmp.eq.s32.totalorder %s22, 3
      %p66 = por %p64, %p65
      %p68 = scmp.ne.s32.totalorder %s51, %s67
      %p69 = scmp.eq.s32.totalorder %s22, 0
      %p70 = por %p68, %p69
      %s72 = sadd.s32 %s71, 1
      %p75 = scmp.eq.s32.totalorder %s16, 3
      %p76 = scmp.ne.s32.totalorder %s71, %s73
      %p77 = scmp.eq.s32.totalorder %s16, 0
      %p78 = por %p76, %p77
      %p79 = scmp.ne.s32.totalorder %s71, %s73
      %p80 = scmp.eq.s32.totalorder %s21, 3
      %p81 = por %p79, %p80
      %p82 = scmp.ne.s32.totalorder %s73, %s74
      %p83 = scmp.eq.s32.totalorder %s21, 0
      %p84 = por %p82, %p83
      %p85 = scmp.ne.s32.totalorder %s73, %s74
      %p86 = scmp.eq.s32.totalorder %s22, 3
      %p87 = por %p85, %p86
      %p89 = scmp.ne.s32.totalorder %s74, %s88
      %p90 = scmp.eq.s32.totalorder %s22, 0
      %p91 = por %p89, %p90
      %s93 = sadd.s32 %s92, 1
      %p96 = scmp.eq.s32.totalorder %s16, 3
      %p97 = scmp.ne.s32.totalorder %s92, %s94
      %p98 = scmp.eq.s32.totalorder %s16, 0
      %p99 = por %p97, %p98
      %p100 = scmp.ne.s32.totalorder %s92, %s94
      %p101 = scmp.eq.s32.totalorder %s21, 3
      %p102 = por %p100, %p101
      %p103 = scmp.ne.s32.totalorder %s94, %s95
      %p104 = scmp.eq.s32.totalorder %s21, 0
      %p105 = por %p103, %p104
      %p106 = scmp.ne.s32.totalorder %s94, %s95
      %p107 = scmp.eq.s32.totalorder %s22, 3
      %p108 = por %p106, %p107
      %p110 = scmp.ne.s32.totalorder %s95, %s109
      %p111 = scmp.eq.s32.totalorder %s22, 0
      %p112 = por %p110, %p111
      %s114 = sadd.s32 %s113, 1
      %p117 = scmp.eq.s32.totalorder %s16, 3
      %p118 = scmp.ne.s32.totalorder %s113, %s115
      %p119 = scmp.eq.s32.totalorder %s16, 0
      %p120 = por %p118, %p119
      %p121 = scmp.ne.s32.totalorder %s113, %s115
      %p122 = scmp.eq.s32.totalorder %s21, 3
      %p123 = por %p121, %p122
      %p124 = scmp.ne.s32.totalorder %s115, %s116
      %p125 = scmp.eq.s32.totalorder %s21, 0
      %p126 = por %p124, %p125
      %p127 = scmp.ne.s32.totalorder %s115, %s116
      %p128 = scmp.eq.s32.totalorder %s22, 3
      %p129 = por %p127, %p128
      %p131 = scmp.ne.s32.totalorder %s116, %s130
      %p132 = scmp.eq.s32.totalorder %s22, 0
      %p133 = por %p131, %p132
      %s134 = smul.u32 %s25, %s24
      %s135 = smul.u32 %s34, %s38
      %s136 = ssub.s32 %s23, %s42
      %s137 = ssub.s32 %s134, %s135
      %s138 = sor.u32 %s136, %s137
      %p139 = scmp.eq.s32.totalorder %s138, 0
      %s141 = sadd.s32 %s140, 1
      %s142 = scalar_select %p139, %s140, %s141
      %p145 = pneg %p139
      %p146 = scmp.eq.s32.totalorder %s16, 3
      %p147 = por %p145, %p146
      %p148 = scmp.ne.s32.totalorder %s140, %s143
      %p149 = scmp.eq.s32.totalorder %s16, 0
      %p150 = por %p148, %p149
      %p151 = scmp.ne.s32.totalorder %s140, %s143
      %p152 = scmp.eq.s32.totalorder %s21, 3
      %p153 = por %p151, %p152
      %p154 = scmp.ne.s32.totalorder %s143, %s144
      %p155 = scmp.eq.s32.totalorder %s21, 0
      %p156 = por %p154, %p155
      %p157 = scmp.ne.s32.totalorder %s143, %s144
      %p158 = scmp.eq.s32.totalorder %s22, 3
      %p159 = por %p157, %p158
      %p161 = scmp.ne.s32.totalorder %s144, %s160
      %p162 = scmp.eq.s32.totalorder %s22, 0
      %p163 = por %p161, %p162
      %p164 = scmp.le.s32.totalorder 1, %s16
      %p165 = scmp.lt.s32.totalorder %s16, 5
      %p166 = pnand %p164, %p165
      %p167 = pneg %p166
      // Predicated region
      $region9: #{tpu_custom_call.1} parent=5 // pred_check
        _
      $region10: #{tpu_custom_call.1} parent=5 // pred_check_branch
        %169 = sbr.rel (%p166) target = $region12
      $region11: #{tpu_custom_call.1} parent=5 // pred_region
        %s170 = ssub.s32 %s16, 1
        // Predicated region
        $region13: #{tpu_custom_call.1} parent=11 // pred_check
          %p171 = pneg %p84
        $region14: #{tpu_custom_call.1} parent=11 // pred_check_branch
          %173 = sbr.rel (%p171) target = $region16
        $region15: #{tpu_custom_call.1} parent=11 // pred_region
          _
        $region16: #{tpu_custom_call.1} parent=11 // pred_fallthru
          _
        // Predicated region
        $region17: #{tpu_custom_call.1} parent=11 // pred_check
          %p174 = pneg %p105
        $region18: #{tpu_custom_call.1} parent=11 // pred_check_branch
          %176 = sbr.rel (%p174) target = $region20
        $region19: #{tpu_custom_call.1} parent=11 // pred_region
          _
        $region20: #{tpu_custom_call.1} parent=11 // pred_fallthru
          _
        // Predicated region
        $region21: #{tpu_custom_call.1} parent=11 // pred_check
          %p177 = pneg %p126
        $region22: #{tpu_custom_call.1} parent=11 // pred_check_branch
          %179 = sbr.rel (%p177) target = $region24
        $region23: #{tpu_custom_call.1} parent=11 // pred_region
          _
        $region24: #{tpu_custom_call.1} parent=11 // pred_fallthru
          _
      $region12: #{tpu_custom_call.1} parent=5 // pred_fallthru
        _
      %p180 = scmp.lt.s32.totalorder %s16, 4
      // Predicated region
      $region25: #{tpu_custom_call.1} parent=5 // pred_check
        %p181 = pneg %p180
      $region26: #{tpu_custom_call.1} parent=5 // pred_check_branch
        %183 = sbr.rel (%p181) target = $region28
      $region27: #{tpu_custom_call.1} parent=5 // pred_region
        // Predicated region
        $region29: #{tpu_custom_call.1} parent=27 // pred_check
          %p184 = pneg %p57
        $region30: #{tpu_custom_call.1} parent=27 // pred_check_branch
          %186 = sbr.rel (%p184) target = $region32
        $region31: #{tpu_custom_call.1} parent=27 // pred_region
          %s187 = sand.u32 %s47, 1
          %s188 = scalar_lea.sflag [#allocation4], %s187
          %s189 = sand.u32 %s47, 1
          %s190 = smul.addr %s189, 16
          %s191 = scalar_lea.vmem [#allocation3], %s190
          %s192 = smul.u32 2, %s25
          %194 = vsyncadd %s188, 0
          %s195 = smul.addr %s23, 4
          %s196 = sadd.s32 %s192, %s195
          %s197 = smul.addr %s196, 4
          %s198 = scalar_lea.hbm %s0, %s197
          %s199 = sshll.u32 %s198, 4
          %s200 = int_to_ptr.hbm [resolvable:$true] %s199
          %s201 = sshll.u32 %s191, 4
          %s202 = int_to_ptr.vmem [resolvable:$true] %s201
          %207 = dma.hbm_to_vmem [thread:$0]  %s200, 256, %s202, %s188, 128, 128, 8
        $region32: #{tpu_custom_call.1} parent=27 // pred_fallthru
          _
      $region28: #{tpu_custom_call.1} parent=5 // pred_fallthru
        _
      %p208 = scmp.le.s32.totalorder 1, %s16
      %p209 = scmp.lt.s32.totalorder %s16, 5
      %p210 = pnand %p208, %p209
      %p211 = pneg %p210
      // Predicated region
      $region33: #{tpu_custom_call.1} parent=5 // pred_check
        _
      $region34: #{tpu_custom_call.1} parent=5 // pred_check_branch
        %213 = sbr.rel (%p210) target = $region36
      $region35: #{tpu_custom_call.1} parent=5 // pred_region
        %s214 = ssub.s32 %s16, 1
        %s215 = sand.u32 %s50, 1
        %s216 = scalar_lea.sflag [#allocation4], %s215
        %s217 = sand.u32 %s50, 1
        %s218 = smul.addr %s217, 16
        %s219 = scalar_lea.vmem [#allocation3], %s218
        // Predicated region
        $region37: #{tpu_custom_call.1} parent=35 // pred_check
          %p220 = pneg %p63
        $region38: #{tpu_custom_call.1} parent=35 // pred_check_branch
          %222 = sbr.rel (%p220) target = $region40
        $region39: #{tpu_custom_call.1} parent=35 // pred_region
          %224 = dma.done %s216, 256
        $region40: #{tpu_custom_call.1} parent=35 // pred_fallthru
          _
        %s225 = sand.u32 %s50, 1
        %s226 = scalar_lea.sflag [#allocation4], %s225
        %s227 = sand.u32 %s50, 1
        %s228 = smul.addr %s227, 16
        %s229 = scalar_lea.vmem [#allocation3], %s228
        %p230 = pneg %p63
        %p231 = pneg %p60
        %p232 = pneg %p84
        %p233 = pneg %p81
        %p234 = pneg %p105
        %p235 = pneg %p102
        %p236 = pneg %p126
        %p237 = pneg %p123
        %p238 = pneg %p156
        %p239 = pneg %p153
        %s240 = sand.u32 %s143, 1
        %s241 = scalar_lea.sflag [#allocation5], %s240
        %s242 = sand.u32 %s143, 1
        %s243 = smul.addr %s242, 32
        %s244 = scalar_lea.vmem [#allocation6], %s243
        %s245 = smul.u32 2, %s28
        %s246 = smul.u32 %s28, %s27
        %s247 = smul.u32 2, %s246
        %v249 = vld [vmem:[%s219] sm:$0xff]
        %v250 = vld [vmem:[%s219 + $0x8] sm:$0xff]
        %p251 = scmp.eq.s32.totalorder %s27, 0
        // Predicated region
        $region41: #{tpu_custom_call.1} parent=35 // pred_check
          %p252 = pneg %p251
        $region42: #{tpu_custom_call.1} parent=35 // pred_check_branch
          %254 = sbr.rel (%p252) target = $region44
        $region43: #{tpu_custom_call.1} parent=35 // pred_region
          %p255 = scmp.eq.s32.totalorder %s28, 0
          // Predicated region
          $region45: #{tpu_custom_call.1} parent=43 // pred_check
            %p256 = pneg %p255
          $region46: #{tpu_custom_call.1} parent=43 // pred_check_branch
            %258 = sbr.rel (%p256) target = $region48
          $region47: #{tpu_custom_call.1} parent=43 // pred_region
            %vm259 = vcmask 64512
            %260 = vst.msk [vmem:[#allocation2] sm:$0xff] %vm259, 0.0
          $region48: #{tpu_custom_call.1} parent=43 // pred_fallthru
            _
          %v261 = vld [vmem:[%s1] sm:$0xf]
          %v262 = vld [vmem:[%s1 + $0x4] sm:$0xf]
          %v265 = vunpack.c.l.b16 %v261
          %v266 = vunpack.c.l.b16 %v262
          %v267 = vpack.c.b16 %v266, %v265
          %v270 = vunpack.c.l.b16 %v249
          %v271 = vunpack.c.h.b16 %v249
          %v272 = vunpack.c.l.b16 %v250
          %v273 = vunpack.c.h.b16 %v250
          %v274 = vpack.c.b16 %v272, %v270
          %v275 = vpack.c.b16 %v273, %v271
          %vm278 = vcmask 130048
          %v280 = vsel %vm278, %v267, 0
          %282 = vmatpush.bf16.msra.mxu0 0
          %283 = vmatpush.bf16.msra.mxu0 0
          %284 = vmatpush.bf16.msra.mxu0 0
          %285 = vmatpush.bf16.msra.mxu0 0
          %286 = vmatpush.bf16.msra.mxu0 0
          %287 = vmatpush.bf16.msra.mxu0 0
          %288 = vmatpush.bf16.msra.mxu0 0
          %289 = vmatpush.bf16.msra.mxu0 %v274
          %290 = vmatmul.bf16.gmra.mxu0 %v280
          %v291 = vpop.f32.mrf.mxu0
          %v292 = vadd.f32 0.0, %v291
          %v293 = vpop.f32.mrf.mxu0
          %v294 = vadd.f32 0.0, %v293
          %295 = vdwg.mxu0
          %296 = vmatpush.bf16.msra.mxu0 0
          %297 = vmatpush.bf16.msra.mxu0 0
          %298 = vmatpush.bf16.msra.mxu0 0
          %299 = vmatpush.bf16.msra.mxu0 0
          %300 = vmatpush.bf16.msra.mxu0 0
          %301 = vmatpush.bf16.msra.mxu0 0
          %302 = vmatpush.bf16.msra.mxu0 0
          %303 = vmatpush.bf16.msra.mxu0 %v275
          %304 = vmatmul.bf16.gmra.mxu0 %v280
          %v305 = vpop.f32.mrf.mxu0
          %v306 = vadd.f32 0.0, %v305
          %v307 = vpop.f32.mrf.mxu0
          %v308 = vadd.f32 0.0, %v307
          %309 = vdwg.mxu0
          %v310 = vrot.slane %v294, 1
          %v311 = vrot.slane %v308, 1
          %v312 = vmax.f32 %v294, %v310
          %v313 = vmax.f32 %v308, %v311
          %v314 = vld [vmem:[#allocation2] sm:$0xff]
          %v315 = vpack.c.bf16 %v292, %v292
          %v316 = vpack.c.bf16 %v306, %v306
          %v317 = vpack.c.bf16 %v312, %v312
          %v318 = vpack.c.bf16 %v313, %v313
          %319 = vmatpush.bf16.xpose.msra.mxu0 0
          %320 = vmatpush.bf16.xpose.msra.mxu0 0
          %321 = vmatpush.bf16.xpose.msra.mxu0 0
          %322 = vmatpush.bf16.xpose.msra.mxu0 0
          %323 = vmatpush.bf16.xpose.msra.mxu0 0
          %324 = vmatpush.bf16.xpose.msra.mxu0 0
          %325 = vmatpush.bf16.xpose.msra.mxu0 0
          %326 = vmatpush.bf16.xpose.msra.mxu0 %v317
          %327 = vmatmul.bf16.gmra.mxu0 %v315
          %v328 = vpop.f32.mrf.mxu0
          %v329 = vadd.f32 0.0, %v328
          %v330 = vpop.f32.mrf.mxu0
          %331 = vdwg.mxu0
          %332 = vmatpush.bf16.xpose.msra.mxu0 0
          %333 = vmatpush.bf16.xpose.msra.mxu0 0
          %334 = vmatpush.bf16.xpose.msra.mxu0 0
          %335 = vmatpush.bf16.xpose.msra.mxu0 0
          %336 = vmatpush.bf16.xpose.msra.mxu0 0
          %337 = vmatpush.bf16.xpose.msra.mxu0 0
          %338 = vmatpush.bf16.xpose.msra.mxu0 0
          %339 = vmatpush.bf16.xpose.msra.mxu0 %v318
          %340 = vmatmul.bf16.gmra.mxu0 %v316
          %v341 = vpop.f32.mrf.mxu0
          %v342 = vadd.f32 %v329, %v341
          %v343 = vpop.f32.mrf.mxu0
          %344 = vdwg.mxu0
          %v345 = vadd.f32 %v314, %v342
          %vm346 = vcmask 64512
          %347 = vst.msk [vmem:[#allocation2] sm:$0xff] %vm346, %v345
          // Predicated region
          $region49: #{tpu_custom_call.1} parent=43 // pred_check
            %p348 = pneg %p255
          $region50: #{tpu_custom_call.1} parent=43 // pred_check_branch
            %350 = sbr.rel (%p348) target = $region52
          $region51: #{tpu_custom_call.1} parent=43 // pred_region
            %v351 = vld [vmem:[#allocation2] sm:$0xff]
            %v352 = vlaneseq
            %v353 = vand.u32 %v352, 127
            %vm354 = vcmp.ge.s32.totalorder %v353, 7
            %v355 = vsel %vm354, -1e+30, %v351
            %v356 = vsel %vm346, %v355, -inf
            %357 = vmax.xlane.f32.xlu0 %v356
            %v358 = vpop.xlane.xlu0 %357
            %v359 = vsub.f32 %v355, %v358
            %v360 = vmul.f32 %v359, 1.442695
            %v361 = vpow.pop %v360
            %v362 = vsel %vm346, %v361, 0.0
            %363 = vadd.xlane.f32.xlu0 %v362
            %v364 = vpop.xlane.xlu0 %363
            %v365 = vrcp.pop %v364
            %v366 = vmul.f32 %v361, %v365
            %367 = vst.msk [vmem:[#allocation2] sm:$0xff] %vm346, %v366
          $region52: #{tpu_custom_call.1} parent=43 // pred_fallthru
            _
        $region44: #{tpu_custom_call.1} parent=35 // pred_fallthru
          _
        %p368 = scmp.eq.s32.totalorder %s27, 1
        // Predicated region
        $region53: #{tpu_custom_call.1} parent=35 // pred_check
          %p369 = pneg %p368
        $region54: #{tpu_custom_call.1} parent=35 // pred_check_branch
          %371 = sbr.rel (%p369) target = $region56
        $region55: #{tpu_custom_call.1} parent=35 // pred_region
          %v372 = vld [vmem:[%s2] sm:$0xf]
          %v375 = vunpack.c.l.b16 %v249
          %v376 = vunpack.c.h.b16 %v249
          %v377 = vunpack.c.l.b16 %v250
          %v378 = vunpack.c.h.b16 %v250
          %v379 = vpack.c.b16 %v377, %v375
          %v380 = vpack.c.b16 %v378, %v376
          %vm383 = vcmask 130048
          %v385 = vsel %vm383, %v372, 0
          %387 = vmatpush.bf16.msra.mxu0 0
          %388 = vmatpush.bf16.msra.mxu0 0
          %389 = vmatpush.bf16.msra.mxu0 0
          %390 = vmatpush.bf16.msra.mxu0 0
          %391 = vmatpush.bf16.msra.mxu0 0
          %392 = vmatpush.bf16.msra.mxu0 0
          %393 = vmatpush.bf16.msra.mxu0 0
          %394 = vmatpush.bf16.msra.mxu0 %v379
          %395 = vmatmul.bf16.gmra.mxu0 %v385
          %v396 = vpop.f32.mrf.mxu0
          %v397 = vadd.f32 0.0, %v396
          %v398 = vpop.f32.mrf.mxu0
          %399 = vdwg.mxu0
          %400 = vmatpush.bf16.msra.mxu0 0
          %401 = vmatpush.bf16.msra.mxu0 0
          %402 = vmatpush.bf16.msra.mxu0 0
          %403 = vmatpush.bf16.msra.mxu0 0
          %404 = vmatpush.bf16.msra.mxu0 0
          %405 = vmatpush.bf16.msra.mxu0 0
          %406 = vmatpush.bf16.msra.mxu0 0
          %407 = vmatpush.bf16.msra.mxu0 %v380
          %408 = vmatmul.bf16.gmra.mxu0 %v385
          %v409 = vpop.f32.mrf.mxu0
          %v410 = vadd.f32 0.0, %v409
          %v411 = vpop.f32.mrf.mxu0
          %412 = vdwg.mxu0
          %v413 = vrot.slane %v397, 1
          %v414 = vrot.slane %v410, 1
          %v415 = vmax.f32 %v397, %v413
          %v416 = vmax.f32 %v410, %v414
          %v417 = vld [vmem:[#allocation2] sm:$0xff]
          %v418 = vpack.c.bf16 %v417, %v417
          %v419 = vpack.c.bf16 %v415, %v415
          %v420 = vpack.c.bf16 %v416, %v416
          %vm421 = vcmask 64512
          %v423 = vsel %vm421, %v418, 0
          %vm425 = vcmask 1043456
          %v427 = vsel %vm425, %v419, 0
          %v430 = vsel %vm425, %v420, 0
          %432 = vmatpush.bf16.msra.mxu0 0
          %433 = vmatpush.bf16.msra.mxu0 0
          %434 = vmatpush.bf16.msra.mxu0 0
          %435 = vmatpush.bf16.msra.mxu0 0
          %436 = vmatpush.bf16.msra.mxu0 0
          %437 = vmatpush.bf16.msra.mxu0 0
          %438 = vmatpush.bf16.msra.mxu0 0
          %439 = vmatpush.bf16.msra.mxu0 %v427
          %440 = vmatmul.bf16.gmra.mxu0 %v423
          %v441 = vpop.f32.mrf.mxu0
          %v442 = vadd.f32 0.0, %v441
          %v443 = vpop.f32.mrf.mxu0
          %444 = vdwg.mxu0
          %445 = vmatpush.bf16.msra.mxu0 0
          %446 = vmatpush.bf16.msra.mxu0 0
          %447 = vmatpush.bf16.msra.mxu0 0
          %448 = vmatpush.bf16.msra.mxu0 0
          %449 = vmatpush.bf16.msra.mxu0 0
          %450 = vmatpush.bf16.msra.mxu0 0
          %451 = vmatpush.bf16.msra.mxu0 0
          %452 = vmatpush.bf16.msra.mxu0 %v430
          %453 = vmatmul.bf16.gmra.mxu0 %v423
          %v454 = vpop.f32.mrf.mxu0
          %v455 = vadd.f32 0.0, %v454
          %v456 = vpop.f32.mrf.mxu0
          %457 = vdwg.mxu0
          %v458 = vld [vmem:[%s3] sm:$0xf]
          %v459 = vld [vmem:[%s3 + $0x4] sm:$0xf]
          %v460 = vpack.c.bf16 %v442, %v442
          %v461 = vpack.c.bf16 %v455, %v455
          %v462 = vunpack.c.l.bf16 %v249
          %v463 = vunpack.c.h.bf16 %v249
          %v464 = vunpack.c.l.bf16 %v250
          %v465 = vunpack.c.h.bf16 %v250
          %v468 = vunpack.c.l.b16 %v458
          %v469 = vunpack.c.l.b16 %v459
          %v470 = vpack.c.b16 %v469, %v468
          %v472 = vsel %vm421, %v470, 0
          %v475 = vsel %vm425, %v460, 0
          %v478 = vsel %vm425, %v461, 0
          %480 = vmatpush.bf16.msra.mxu0 0
          %481 = vmatpush.bf16.msra.mxu0 0
          %482 = vmatpush.bf16.msra.mxu0 0
          %483 = vmatpush.bf16.msra.mxu0 0
          %484 = vmatpush.bf16.msra.mxu0 0
          %485 = vmatpush.bf16.msra.mxu0 0
          %486 = vmatpush.bf16.msra.mxu0 0
          %487 = vmatpush.bf16.msra.mxu0 %v475
          %488 = vmatmul.bf16.gmra.mxu0 %v472
          %v489 = vpop.f32.mrf.mxu0
          %v490 = vadd.f32 %v462, %v489
          %v491 = vpop.f32.mrf.mxu0
          %v492 = vadd.f32 %v464, %v491
          %493 = vdwg.mxu0
          %494 = vmatpush.bf16.msra.mxu0 0
          %495 = vmatpush.bf16.msra.mxu0 0
          %496 = vmatpush.bf16.msra.mxu0 0
          %497 = vmatpush.bf16.msra.mxu0 0
          %498 = vmatpush.bf16.msra.mxu0 0
          %499 = vmatpush.bf16.msra.mxu0 0
          %500 = vmatpush.bf16.msra.mxu0 0
          %501 = vmatpush.bf16.msra.mxu0 %v478
          %502 = vmatmul.bf16.gmra.mxu0 %v472
          %v503 = vpop.f32.mrf.mxu0
          %v504 = vadd.f32 %v463, %v503
          %v505 = vpop.f32.mrf.mxu0
          %v506 = vadd.f32 %v465, %v505
          %507 = vdwg.mxu0
          %508 = vst [vmem:[%s244] sm:$0xff] %v490
          %509 = vst [vmem:[%s244 + $0x8] sm:$0xff] %v504
          %510 = vst [vmem:[%s244 + $0x10] sm:$0xff] %v492
          %511 = vst [vmem:[%s244 + $0x18] sm:$0xff] %v506
        $region56: #{tpu_custom_call.1} parent=35 // pred_fallthru
          _
        %s512 = sand.u32 %s143, 1
        %s513 = scalar_lea.sflag [#allocation5], %s512
        %s514 = sand.u32 %s143, 1
        %s515 = smul.addr %s514, 32
        %s516 = scalar_lea.vmem [#allocation6], %s515
        // Predicated region
        $region57: #{tpu_custom_call.1} parent=35 // pred_check
          %p517 = pneg %p153
        $region58: #{tpu_custom_call.1} parent=35 // pred_check_branch
          %519 = sbr.rel (%p517) target = $region60
        $region59: #{tpu_custom_call.1} parent=35 // pred_region
          %s520 = smul.u32 %s28, %s27
          %s521 = smul.u32 2, %s520
          %523 = vsyncadd %s513, 0
          %s524 = smul.addr %s26, 4
          %s525 = sadd.s32 %s521, %s524
          %s526 = smul.addr %s525, 8
          %s527 = scalar_lea.hbm %s4, %s526
          %s528 = sshll.u32 %s516, 4
          %s529 = int_to_ptr.vmem [resolvable:$true] %s528
          %s530 = sshll.u32 %s527, 4
          %s531 = int_to_ptr.hbm [resolvable:$true] %s530
          %536 = dma.vmem_to_hbm [thread:$0]  %s529, 512, %s531, %s513, 256, 256, 16
        $region60: #{tpu_custom_call.1} parent=35 // pred_fallthru
          _
      $region36: #{tpu_custom_call.1} parent=5 // pred_fallthru
        _
      %p537 = scmp.le.s32.totalorder 2, %s16
      // Predicated region
      $region61: #{tpu_custom_call.1} parent=5 // pred_check
        %p538 = pneg %p537
      $region62: #{tpu_custom_call.1} parent=5 // pred_check_branch
        %540 = sbr.rel (%p538) target = $region64
      $region63: #{tpu_custom_call.1} parent=5 // pred_region
        %s541 = ssub.s32 %s16, 2
        // Predicated region
        $region65: #{tpu_custom_call.1} parent=63 // pred_check
          %p542 = pneg %p159
        $region66: #{tpu_custom_call.1} parent=63 // pred_check_branch
          %544 = sbr.rel (%p542) target = $region68
        $region67: #{tpu_custom_call.1} parent=63 // pred_region
          %s545 = sand.u32 %s144, 1
          %s546 = scalar_lea.sflag [#allocation5], %s545
          %s547 = sand.u32 %s144, 1
          %s548 = smul.addr %s547, 32
          %s549 = scalar_lea.vmem [#allocation6], %s548
          %551 = dma.done %s546, 512
        $region68: #{tpu_custom_call.1} parent=63 // pred_fallthru
          _
      $region64: #{tpu_custom_call.1} parent=5 // pred_fallthru
        _
    $region6: #{tpu_custom_call.1} parent=1 // loop_footer
      %s20 = sadd.s32 1, %s16
    $region7: #{tpu_custom_call.1} parent=1 // loop_footer_branch
      %15 = sbr.rel target = $region3
    $region8: #{tpu_custom_call.1} parent=1 // loop_exit
      _
    %552 = vsyncpa [#allocation4], 1
    %s553 = scalar_lea.sflag [#allocation4], 1
    %554 = vsyncpa %s553, 1
    %555 = vsyncpa [#allocation5], 1
    %s556 = scalar_lea.sflag [#allocation5], 1
    %557 = vsyncpa %s556, 1

</llo_original>
